<compile_context>
chip_gen: v5e
topology: v5e:2x2
jax: 0.10.0
libtpu: 0.0.40
codegen_flags: <defaults>
</compile_context>

<pallas_src>
import jax
import jax.numpy as jnp
from jax import lax
from jax.experimental import pallas as pl
from jax.experimental.pallas import tpu as pltpu


def _round_up(x, m):
    return -(-x // m) * m


def _make_gated_kernel(v_offs, h_offs, halo_left):
    """Per-image kernel. Channels on sublanes, padded flat spatial on lanes."""

    def kernel(x_ref, bv_ref, bh_ref, wv_ref, wh_ref, wvh_ref, wh1_ref,
               bh1_ref, out_ref):
        f32 = jnp.float32
        c2 = out_ref.shape[1]          # 2*C
        c = c2 // 2
        p = out_ref.shape[2]           # lane-dense output width (mult. of 128)

        # One cast of the packed tile; every op below is f32.
        x = x_ref[0].astype(f32)       # (2C, tw): rows [0,C)=v, [C,2C)=h
        v_in = x[:c]
        h_in = x[c:]

        def tap_stack(src, offs):
            # In-kernel im2col: static lane-offset slices stacked on sublanes.
            return jnp.concatenate(
                [src[:, halo_left + o: halo_left + o + p] for o in offs],
                axis=0)

        # Vertical masked 3x3 (rows {-1,0}): ONE K=6C dot, val|gate fused.
        # bv already contains the class embedding in its val half.
        v_feat = (jnp.dot(wv_ref[...], tap_stack(v_in, v_offs),
                          preferred_element_type=f32)
                  + bv_ref[0])                                   # (2C, P)

        # Horizontal masked 1x3 (cols {-1,0}) + vert->horiz 1x1, fused biases.
        # bh carries b_h + b_vh + [emb;0] - W_vh^T @ [emb;0] so feeding the
        # embedding-augmented v_feat through W_vh stays exactly equivalent to
        # the reference (which applies W_vh to the un-embedded v features).
        h_feat = (jnp.dot(wh_ref[...], tap_stack(h_in, h_offs),
                          preferred_element_type=f32)
                  + jnp.dot(wvh_ref[...], v_feat, preferred_element_type=f32)
                  + bh_ref[0])                                   # (2C, P)

        # Gating: tanh(val) * sigmoid(gate); sigmoid via tanh (1 EUP push, not 2).
        def gate(feat):
            return jnp.tanh(feat[:c]) * (0.5 * jnp.tanh(0.5 * feat[c:]) + 0.5)

        v_out = gate(v_feat)
        h_mid = gate(h_feat)

        # Final 1x1 conv + residual (residual read straight from the packed tile).
        res = h_in[:, halo_left: halo_left + p]
        h_out = (jnp.dot(wh1_ref[...], h_mid, preferred_element_type=f32)
                 + bh1_ref[...] + res)

        # Single sublane+lane-dense store: rows [0,C)=v_out, [C,2C)=h_out.
        out_ref[0] = jnp.concatenate([v_out, h_out], axis=0).astype(out_ref.dtype)

    return kernel


def init_params(key, c_in, num_classes=10):
    """Deterministic synthetic params. Masked taps only are stored:
       w_v: (2,3,C,2C) vertical 3x3 rows {0,1};  w_h: (2,C,2C) horizontal cols {0,1}."""
    C = c_in
    ks = jax.random.split(key, 9)
    s = 0.1
    return dict(
        w_v=s * jax.random.normal(ks[0], (2, 3, C, 2 * C), jnp.float32),
        b_v=s * jax.random.normal(ks[1], (2 * C,), jnp.float32),
        w_h=s * jax.random.normal(ks[2], (2, C, 2 * C), jnp.float32),
        b_h=s * jax.random.normal(ks[3], (2 * C,), jnp.float32),
        w_vh=s * jax.random.normal(ks[4], (2 * C, 2 * C), jnp.float32),  # (in, out)
        b_vh=s * jax.random.normal(ks[5], (2 * C,), jnp.float32),
        w_h1=s * jax.random.normal(ks[6], (C, C), jnp.float32),          # (in, out)
        b_h1=s * jax.random.normal(ks[7], (C,), jnp.float32),
        emb_table=s * jax.random.normal(ks[8], (num_classes, C), jnp.float32),
    )


def gated_masked_conv(v_stack, h_stack, class_labels, params, *,
                      storage_dtype=jnp.float32):
    """v_stack, h_stack: (B, C, H, W) f32; class_labels: (B,) int.
       Returns (v_stack_out, h_stack_out) in NCHW, matching the PyTorch module.
       storage_dtype only controls the HBM dtype of the packed activations
       (bf16 halves input DMA on v6e/v7x); all kernel math is f32."""
    B, C, H, W = v_stack.shape
    C2 = 2 * C
    Hp, Wp = H + 2, W + 2
    flat_len = Hp * Wp
    P = _round_up(flat_len, 128)      # lane-dense output width per image
    HL = Wp + 1                       # left halo = |most negative tap offset|
    HR = 1                            # right halo = most positive tap offset
    tw = HL + P + HR

    # Pack v|h on sublanes, zero-pad spatially, flatten HW, add lane halos.
    # This is the only pre-kernel pass over the activations.
    x = jnp.concatenate([v_stack, h_stack], axis=1)               # (B, 2C, H, W)
    x = jnp.pad(x, ((0, 0), (0, 0), (1, 1), (1, 1))).reshape(B, C2, flat_len)
    x = jnp.pad(x, ((0, 0), (0, 0), (HL, tw - HL - flat_len))).astype(storage_dtype)

    # Masked-conv tap offsets in padded-flat coordinates (dy*Wp + dx).
    v_offs = tuple(dy * Wp + dx for dy in (-1, 0) for dx in (-1, 0, 1))
    h_offs = (-1, 0)

    f32 = jnp.float32
    # Fused weights: out = W @ stacked_taps, stacked row index = tap*C + cin.
    wv6 = jnp.transpose(params['w_v'].reshape(6, C, C2), (2, 0, 1)
                        ).reshape(C2, 6 * C).astype(f32)
    wh2 = jnp.transpose(params['w_h'], (2, 0, 1)).reshape(C2, 2 * C).astype(f32)
    wvh = params['w_vh'].T.astype(f32)            # (out, in)
    wh1 = params['w_h1'].T.astype(f32)            # (out, in)
    bh1 = params['b_h1'].reshape(C, 1).astype(f32)

    # TODO(synk): embedding gather stays in plain JAX (pure indexing glue).
    emb = params['emb_table'][class_labels].astype(f32)               # (B, C)
    e_full = jnp.concatenate([emb, jnp.zeros((B, C), f32)], axis=1)   # (B, 2C)
    # Fold emb into per-batch biases; correct the horizontal bias so the
    # in-kernel W_vh @ (v_feat + [emb;0]) is exactly equivalent to the module.
    bv_b = (params['b_v'][None, :] + e_full)[..., None]               # (B, 2C, 1)
    bh_b = ((params['b_h'] + params['b_vh'])[None, :] + e_full
            - e_full @ params['w_vh'])[..., None]                     # (B, 2C, 1)

    def const_spec(a):                 # resident weights: constant block index
        nd = a.ndim
        return pl.BlockSpec(a.shape, lambda b, _nd=nd: (0,) * _nd)

    in_specs = [
        pl.BlockSpec((1, C2, tw), lambda b: (b, 0, 0)),   # packed v|h image
        pl.BlockSpec((1, C2, 1), lambda b: (b, 0, 0)),    # per-batch vert bias (+emb)
        pl.BlockSpec((1, C2, 1), lambda b: (b, 0, 0)),    # per-batch horiz bias
        const_spec(wv6), const_spec(wh2), const_spec(wvh),
        const_spec(wh1), const_spec(bh1),
    ]
    out_spec = pl.BlockSpec((1, C2, P), lambda b: (b, 0, 0))

    # Deliberate VMEM budget: double-buffered I/O blocks + resident weights +
    # f32 temporaries, clamped to the scoped-default-safe range on v5e/v6e/v7x.
    item = jnp.dtype(storage_dtype).itemsize
    io_bytes = C2 * tw * item + C2 * P * 4 + 2 * C2 * 4
    w_bytes = 4 * (wv6.size + wh2.size + wvh.size + wh1.size + bh1.size)
    tmp_bytes = (6 * C + 2 * C + 6 * C2) * P * 4
    vmem_limit = int(min(max(2 * (io_bytes + w_bytes) + tmp_bytes + (1 << 20),
                             4 << 20), 32 << 20))

    out = pl.pallas_call(
        _make_gated_kernel(v_offs, h_offs, HL),
        grid=(B,),                     # single parallel axis (v7x: 2 TensorCores)
        in_specs=in_specs,
        out_specs=out_spec,
        out_shape=jax.ShapeDtypeStruct((B, C2, P), jnp.float32),
        compiler_params=pltpu.CompilerParams(
            dimension_semantics=("parallel",),
            vmem_limit_bytes=vmem_limit),
    )(x, bv_b, bh_b, wv6, wh2, wvh, wh1, bh1)

    # Strip padding: padded-flat -> (Hp, Wp) -> crop back to H x W (already NCHW).
    out = out[:, :, :flat_len].reshape(B, C2, Hp, Wp)[:, :, 1:H + 1, 1:W + 1]
    return out[:, :C], out[:, C:]


def reference_forward(v_stack, h_stack, class_labels, p):
    """Pure-JAX reference using lax.conv_general_dilated (independent of the kernel)."""
    B, C, H, W = v_stack.shape
    v = jnp.transpose(v_stack, (0, 2, 3, 1))
    h = jnp.transpose(h_stack, (0, 2, 3, 1))
    hp = lax.Precision.HIGHEST
    dn = ('NHWC', 'HWIO', 'NHWC')
    w_vert = jnp.concatenate([p['w_v'], jnp.zeros((1, 3, C, 2 * C), jnp.float32)], axis=0)
    w_horiz = jnp.concatenate([p['w_h'], jnp.zeros((1, C, 2 * C), jnp.float32)], axis=0)[None]
    vf = lax.conv_general_dilated(v, w_vert, (1, 1), ((1, 1), (1, 1)),
                                  dimension_numbers=dn, precision=hp) + p['b_v']
    hf = lax.conv_general_dilated(h, w_horiz, (1, 1), ((0, 0), (1, 1)),
                                  dimension_numbers=dn, precision=hp) + p['b_h']
    emb = p['emb_table'][class_labels][:, None, None, :]
    v_val, v_gate = vf[..., :C], vf[..., C:]
    v_out = jnp.tanh(v_val + emb) * jax.nn.sigmoid(v_gate)
    hf = hf + jnp.einsum('bhwc,cd->bhwd', vf, p['w_vh'], precision=hp) + p['b_vh']
    h_val, h_gate = hf[..., :C], hf[..., C:]
    h_mid = jnp.tanh(h_val + emb) * jax.nn.sigmoid(h_gate)
    h_out = jnp.einsum('bhwc,cd->bhwd', h_mid, p['w_h1'], precision=hp) + p['b_h1'] + h
    to_nchw = lambda t: jnp.transpose(t, (0, 3, 1, 2))
    return to_nchw(v_out), to_nchw(h_out)


if __name__ == "__main__":
    key = jax.random.PRNGKey(0)
    B, C, H, W = 2, 4, 16, 16
    num_classes = 10
    k1, k2, k3, k4 = jax.random.split(key, 4)
    v_stack = jax.random.normal(k1, (B, C, H, W), jnp.float32)
    h_stack = jax.random.normal(k2, (B, C, H, W), jnp.float32)
    class_labels = jax.random.randint(k3, (B,), 0, num_classes)
    params = init_params(k4, C, num_classes)

    v_ref, h_ref = reference_forward(v_stack, h_stack, class_labels, params)

    # Default path: f32 storage + f32 math, one whole image per grid step.
    v_out, h_out = gated_masked_conv(v_stack, h_stack, class_labels, params)
    jax.block_until_ready((v_out, h_out))
    assert v_out.shape == (B, C, H, W) and h_out.shape == (B, C, H, W)
    assert jnp.allclose(v_out, v_ref, atol=2e-3, rtol=2e-3), "vertical stack mismatch (f32)"
    assert jnp.allclose(h_out, h_ref, atol=2e-3, rtol=2e-3), "horizontal stack mismatch (f32)"

    # bf16-storage path (all math still f32): exercises the halved input-DMA path.
    v_bf, h_bf = gated_masked_conv(v_stack, h_stack, class_labels, params,
                                   storage_dtype=jnp.bfloat16)
    jax.block_until_ready((v_bf, h_bf))
    assert jnp.allclose(v_bf, v_ref, atol=3e-2, rtol=3e-2), "vertical stack mismatch (bf16 storage)"
    assert jnp.allclose(h_bf, h_ref, atol=3e-2, rtol=3e-2), "horizontal stack mismatch (bf16 storage)"

    print("KERNEL_OK")
</pallas_src>

<mosaic_0001>
module attributes {stable_mosaic.version = 11 : i64} {
  func.func @kernel(%arg0: i32, %arg1: memref<1x8x404xf32, #tpu.memory_space<vmem>>, %arg2: memref<1x8x1xf32, #tpu.memory_space<vmem>>, %arg3: memref<1x8x1xf32, #tpu.memory_space<vmem>>, %arg4: memref<8x24xf32, #tpu.memory_space<vmem>>, %arg5: memref<8x8xf32, #tpu.memory_space<vmem>>, %arg6: memref<8x8xf32, #tpu.memory_space<vmem>>, %arg7: memref<4x4xf32, #tpu.memory_space<vmem>>, %arg8: memref<4x1xf32, #tpu.memory_space<vmem>>, %arg9: memref<1x8x384xf32, #tpu.memory_space<vmem>>) attributes {dimension_semantics = [#tpu.dimension_semantics<parallel>], iteration_bounds = array<i64: 2>, scalar_prefetch = 0 : i64, scratch_operands = 0 : i64, tpu.core_type = #tpu.core_type<tc>, window_params = [{transform_indices = @transform_0, window_bounds = array<i64: 1, 8, 404>}, {transform_indices = @transform_1, window_bounds = array<i64: 1, 8, 1>}, {transform_indices = @transform_2, window_bounds = array<i64: 1, 8, 1>}, {pipeline_mode = #tpu.pipeline_mode<synchronous>, transform_indices = @transform_3, window_bounds = array<i64: 8, 24>}, {pipeline_mode = #tpu.pipeline_mode<synchronous>, transform_indices = @transform_4, window_bounds = array<i64: 8, 8>}, {pipeline_mode = #tpu.pipeline_mode<synchronous>, transform_indices = @transform_5, window_bounds = array<i64: 8, 8>}, {pipeline_mode = #tpu.pipeline_mode<synchronous>, transform_indices = @transform_6, window_bounds = array<i64: 4, 4>}, {pipeline_mode = #tpu.pipeline_mode<synchronous>, transform_indices = @transform_7, window_bounds = array<i64: 4, 1>}, {transform_indices = @transform_8, window_bounds = array<i64: 1, 8, 384>}]} {
    %c0 = arith.constant 0 : index
    %c0_0 = arith.constant 0 : index
    %c0_1 = arith.constant 0 : index
    %0 = vector.load %arg1[%c0, %c0_0, %c0_1] : memref<1x8x404xf32, #tpu.memory_space<vmem>>, vector<1x8x404xf32>
    %1 = vector.shape_cast %0 : vector<1x8x404xf32> to vector<8x404xf32>
    %2 = vector.extract_strided_slice %1 {offsets = [0, 0], sizes = [4, 404], strides = [1, 1]} : vector<8x404xf32> to vector<4x404xf32>
    %3 = vector.extract_strided_slice %1 {offsets = [4, 0], sizes = [4, 404], strides = [1, 1]} : vector<8x404xf32> to vector<4x404xf32>
    %c0_2 = arith.constant 0 : index
    %c0_3 = arith.constant 0 : index
    %4 = vector.load %arg4[%c0_2, %c0_3] : memref<8x24xf32, #tpu.memory_space<vmem>>, vector<8x24xf32>
    %5 = vector.extract_strided_slice %2 {offsets = [0, 0], sizes = [4, 384], strides = [1, 1]} : vector<4x404xf32> to vector<4x384xf32>
    %6 = vector.extract_strided_slice %2 {offsets = [0, 1], sizes = [4, 384], strides = [1, 1]} : vector<4x404xf32> to vector<4x384xf32>
    %7 = vector.extract_strided_slice %2 {offsets = [0, 2], sizes = [4, 384], strides = [1, 1]} : vector<4x404xf32> to vector<4x384xf32>
    %8 = vector.extract_strided_slice %2 {offsets = [0, 18], sizes = [4, 384], strides = [1, 1]} : vector<4x404xf32> to vector<4x384xf32>
    %9 = vector.extract_strided_slice %2 {offsets = [0, 19], sizes = [4, 384], strides = [1, 1]} : vector<4x404xf32> to vector<4x384xf32>
    %10 = vector.extract_strided_slice %2 {offsets = [0, 20], sizes = [4, 384], strides = [1, 1]} : vector<4x404xf32> to vector<4x384xf32>
    %11 = tpu.concatenate %5, %6, %7, %8, %9, %10 in 0 : vector<4x384xf32>, vector<4x384xf32>, vector<4x384xf32>, vector<4x384xf32>, vector<4x384xf32>, vector<4x384xf32> -> vector<24x384xf32>
    %cst = arith.constant dense<0.000000e+00> : vector<8x384xf32>
    %12 = tpu.matmul %4, %11, %cst {dimension_numbers = #tpu.dot_dimension_numbers<[1], [0], [0], [1], [0, 0, 1, 1], [], []>} : vector<8x24xf32>, vector<24x384xf32>, vector<8x384xf32> -> vector<8x384xf32>
    %c0_4 = arith.constant 0 : index
    %c0_5 = arith.constant 0 : index
    %c0_6 = arith.constant 0 : index
    %13 = vector.load %arg2[%c0_4, %c0_5, %c0_6] : memref<1x8x1xf32, #tpu.memory_space<vmem>>, vector<1x8x1xf32>
    %14 = vector.shape_cast %13 : vector<1x8x1xf32> to vector<8x1xf32>
    %15 = vector.broadcast %14 : vector<8x1xf32> to vector<8x384xf32>
    %16 = arith.addf %12, %15 : vector<8x384xf32>
    %c0_7 = arith.constant 0 : index
    %c0_8 = arith.constant 0 : index
    %17 = vector.load %arg5[%c0_7, %c0_8] : memref<8x8xf32, #tpu.memory_space<vmem>>, vector<8x8xf32>
    %18 = vector.extract_strided_slice %3 {offsets = [0, 18], sizes = [4, 384], strides = [1, 1]} : vector<4x404xf32> to vector<4x384xf32>
    %19 = vector.extract_strided_slice %3 {offsets = [0, 19], sizes = [4, 384], strides = [1, 1]} : vector<4x404xf32> to vector<4x384xf32>
    %20 = tpu.concatenate %18, %19 in 0 : vector<4x384xf32>, vector<4x384xf32> -> vector<8x384xf32>
    %cst_9 = arith.constant dense<0.000000e+00> : vector<8x384xf32>
    %21 = tpu.matmul %17, %20, %cst_9 {dimension_numbers = #tpu.dot_dimension_numbers<[1], [0], [0], [1], [0, 0, 1, 1], [], []>} : vector<8x8xf32>, vector<8x384xf32>, vector<8x384xf32> -> vector<8x384xf32>
    %c0_10 = arith.constant 0 : index
    %c0_11 = arith.constant 0 : index
    %22 = vector.load %arg6[%c0_10, %c0_11] : memref<8x8xf32, #tpu.memory_space<vmem>>, vector<8x8xf32>
    %cst_12 = arith.constant dense<0.000000e+00> : vector<8x384xf32>
    %23 = tpu.matmul %22, %16, %cst_12 {dimension_numbers = #tpu.dot_dimension_numbers<[1], [0], [0], [1], [0, 0, 1, 1], [], []>} : vector<8x8xf32>, vector<8x384xf32>, vector<8x384xf32> -> vector<8x384xf32>
    %24 = arith.addf %21, %23 : vector<8x384xf32>
    %c0_13 = arith.constant 0 : index
    %c0_14 = arith.constant 0 : index
    %c0_15 = arith.constant 0 : index
    %25 = vector.load %arg3[%c0_13, %c0_14, %c0_15] : memref<1x8x1xf32, #tpu.memory_space<vmem>>, vector<1x8x1xf32>
    %26 = vector.shape_cast %25 : vector<1x8x1xf32> to vector<8x1xf32>
    %27 = vector.broadcast %26 : vector<8x1xf32> to vector<8x384xf32>
    %28 = arith.addf %24, %27 : vector<8x384xf32>
    %29 = vector.extract_strided_slice %16 {offsets = [0, 0], sizes = [4, 384], strides = [1, 1]} : vector<8x384xf32> to vector<4x384xf32>
    %30 = math.tanh %29 : vector<4x384xf32>
    %31 = vector.extract_strided_slice %16 {offsets = [4, 0], sizes = [4, 384], strides = [1, 1]} : vector<8x384xf32> to vector<4x384xf32>
    %cst_16 = arith.constant 5.000000e-01 : f32
    %32 = vector.broadcast %cst_16 : f32 to vector<4x384xf32>
    %33 = arith.mulf %32, %31 : vector<4x384xf32>
    %34 = math.tanh %33 : vector<4x384xf32>
    %cst_17 = arith.constant 5.000000e-01 : f32
    %35 = vector.broadcast %cst_17 : f32 to vector<4x384xf32>
    %36 = arith.mulf %35, %34 : vector<4x384xf32>
    %cst_18 = arith.constant 5.000000e-01 : f32
    %37 = vector.broadcast %cst_18 : f32 to vector<4x384xf32>
    %38 = arith.addf %36, %37 : vector<4x384xf32>
    %39 = arith.mulf %30, %38 : vector<4x384xf32>
    %40 = vector.extract_strided_slice %28 {offsets = [0, 0], sizes = [4, 384], strides = [1, 1]} : vector<8x384xf32> to vector<4x384xf32>
    %41 = math.tanh %40 : vector<4x384xf32>
    %42 = vector.extract_strided_slice %28 {offsets = [4, 0], sizes = [4, 384], strides = [1, 1]} : vector<8x384xf32> to vector<4x384xf32>
    %cst_19 = arith.constant 5.000000e-01 : f32
    %43 = vector.broadcast %cst_19 : f32 to vector<4x384xf32>
    %44 = arith.mulf %43, %42 : vector<4x384xf32>
    %45 = math.tanh %44 : vector<4x384xf32>
    %cst_20 = arith.constant 5.000000e-01 : f32
    %46 = vector.broadcast %cst_20 : f32 to vector<4x384xf32>
    %47 = arith.mulf %46, %45 : vector<4x384xf32>
    %cst_21 = arith.constant 5.000000e-01 : f32
    %48 = vector.broadcast %cst_21 : f32 to vector<4x384xf32>
    %49 = arith.addf %47, %48 : vector<4x384xf32>
    %50 = arith.mulf %41, %49 : vector<4x384xf32>
    %51 = vector.extract_strided_slice %3 {offsets = [0, 19], sizes = [4, 384], strides = [1, 1]} : vector<4x404xf32> to vector<4x384xf32>
    %c0_22 = arith.constant 0 : index
    %c0_23 = arith.constant 0 : index
    %52 = vector.load %arg7[%c0_22, %c0_23] : memref<4x4xf32, #tpu.memory_space<vmem>>, vector<4x4xf32>
    %cst_24 = arith.constant dense<0.000000e+00> : vector<4x384xf32>
    %53 = tpu.matmul %52, %50, %cst_24 {dimension_numbers = #tpu.dot_dimension_numbers<[1], [0], [0], [1], [0, 0, 1, 1], [], []>} : vector<4x4xf32>, vector<4x384xf32>, vector<4x384xf32> -> vector<4x384xf32>
    %c0_25 = arith.constant 0 : index
    %c0_26 = arith.constant 0 : index
    %54 = vector.load %arg8[%c0_25, %c0_26] : memref<4x1xf32, #tpu.memory_space<vmem>>, vector<4x1xf32>
    %55 = vector.broadcast %54 : vector<4x1xf32> to vector<4x384xf32>
    %56 = arith.addf %53, %55 : vector<4x384xf32>
    %57 = arith.addf %56, %51 : vector<4x384xf32>
    %58 = tpu.concatenate %39, %57 in 0 : vector<4x384xf32>, vector<4x384xf32> -> vector<8x384xf32>
    %c0_27 = arith.constant 0 : index
    %c0_28 = arith.constant 0 : index
    %c0_29 = arith.constant 0 : index
    %59 = vector.load %arg9[%c0_27, %c0_28, %c0_29] : memref<1x8x384xf32, #tpu.memory_space<vmem>>, vector<1x8x384xf32>
    %60 = vector.shape_cast %59 : vector<1x8x384xf32> to vector<8x384xf32>
    %61 = vector.shape_cast %58 : vector<8x384xf32> to vector<1x8x384xf32>
    tpu.vector_store %arg9[%c0_27, %c0_28, %c0_29], %61 {strides = array<i32>} : memref<1x8x384xf32, #tpu.memory_space<vmem>>, vector<1x8x384xf32>,
    return
  }
  func.func @transform_0(%arg0: i32) -> (i32, i32, i32) {
    %c0_i32 = arith.constant 0 : i32
    %c0_i32_0 = arith.constant 0 : i32
    %c0_i32_1 = arith.constant 0 : i32
    return %arg0, %c0_i32, %c0_i32_0 : i32, i32, i32
  }
  func.func @transform_1(%arg0: i32) -> (i32, i32, i32) {
    %c0_i32 = arith.constant 0 : i32
    %c0_i32_0 = arith.constant 0 : i32
    %c0_i32_1 = arith.constant 0 : i32
    return %arg0, %c0_i32, %c0_i32_0 : i32, i32, i32
  }
  func.func @transform_2(%arg0: i32) -> (i32, i32, i32) {
    %c0_i32 = arith.constant 0 : i32
    %c0_i32_0 = arith.constant 0 : i32
    %c0_i32_1 = arith.constant 0 : i32
    return %arg0, %c0_i32, %c0_i32_0 : i32, i32, i32
  }
  func.func @transform_3(%arg0: i32) -> (i32, i32) {
    %c0_i32 = arith.constant 0 : i32
    %c0_i32_0 = arith.constant 0 : i32
    %c0_i32_1 = arith.constant 0 : i32
    return %c0_i32, %c0_i32_0 : i32, i32
  }
  func.func @transform_4(%arg0: i32) -> (i32, i32) {
    %c0_i32 = arith.constant 0 : i32
    %c0_i32_0 = arith.constant 0 : i32
    %c0_i32_1 = arith.constant 0 : i32
    return %c0_i32, %c0_i32_0 : i32, i32
  }
  func.func @transform_5(%arg0: i32) -> (i32, i32) {
    %c0_i32 = arith.constant 0 : i32
    %c0_i32_0 = arith.constant 0 : i32
    %c0_i32_1 = arith.constant 0 : i32
    return %c0_i32, %c0_i32_0 : i32, i32
  }
  func.func @transform_6(%arg0: i32) -> (i32, i32) {
    %c0_i32 = arith.constant 0 : i32
    %c0_i32_0 = arith.constant 0 : i32
    %c0_i32_1 = arith.constant 0 : i32
    return %c0_i32, %c0_i32_0 : i32, i32
  }
  func.func @transform_7(%arg0: i32) -> (i32, i32) {
    %c0_i32 = arith.constant 0 : i32
    %c0_i32_0 = arith.constant 0 : i32
    %c0_i32_1 = arith.constant 0 : i32
    return %c0_i32, %c0_i32_0 : i32, i32
  }
  func.func @transform_8(%arg0: i32) -> (i32, i32, i32) {
    %c0_i32 = arith.constant 0 : i32
    %c0_i32_0 = arith.constant 0 : i32
    %c0_i32_1 = arith.constant 0 : i32
    return %arg0, %c0_i32, %c0_i32_0 : i32, i32, i32
  }
}

</mosaic_0001>

<llo_original>
// kernel: tpu_custom_call.1
$region0: #{tpu_custom_call.1}
  #allocation0 [shape = 'u32[]', space=smem, size = 0x4, offset = 0x4, fixed_abs, tag = 'smem constant byte address 0x4 - core index']
  #allocation1 [shape = 'u32[72,128]{1,0:T(1,128)}', space=vmem, size = 0x9000, scoped, tag = 'internal scratch']
  %s0 = inlined_call_operand.hbm [shape: f32[2,8,404], index: 0, kind: input, shape index: {}]
  %s1 = inlined_call_operand.vmem [shape: f32[2,8,1], index: 1, kind: input, shape index: {}]
  %s2 = inlined_call_operand.vmem [shape: f32[2,8,1], index: 2, kind: input, shape index: {}]
  %s3 = inlined_call_operand.vmem [shape: f32[8,24], index: 3, kind: input, shape index: {}]
  %s4 = inlined_call_operand.vmem [shape: f32[8,8], index: 4, kind: input, shape index: {}]
  %s5 = inlined_call_operand.vmem [shape: f32[8,8], index: 5, kind: input, shape index: {}]
  %s6 = inlined_call_operand.vmem [shape: f32[4,4], index: 6, kind: input, shape index: {}]
  %s7 = inlined_call_operand.vmem [shape: f32[4,1], index: 7, kind: input, shape index: {}]
  %s8 = inlined_call_operand.hbm [shape: f32[2,8,384], index: 8, kind: output, shape index: {}]
  %s9 = sld [smem:[#allocation0]]
  $region69: #{tpu_custom_call.1} parent=0
    _
  %s11 = ssub.s32 1, %s9
  %s12 = scalar_select 0, %s11, %s9
  $region1: #{tpu_custom_call.1} parent=0
    #allocation2 [shape = 'u8[32768]{0}', space=vmem, size = 0x8000, scoped, tag = 'input window, operand 0']
    #allocation3 [shape = 's32[2]{0}', space=sflag, size = 0x8, scoped, tag = 'scoped memory for tpu_custom_call.1']
    #allocation4 [shape = 's32[2]{0}', space=sflag, size = 0x8, scoped, tag = 'scoped memory for tpu_custom_call.1']
    #allocation5 [shape = 'u8[24576]{0}', space=vmem, size = 0x6000, scoped, tag = 'output window, operand 0']
    %13 = vsyncpa [#allocation3], 0
    %s14 = scalar_lea.sflag [#allocation3], 1
    %15 = vsyncpa %s14, 0
    %16 = vsyncpa [#allocation4], 0
    %s17 = scalar_lea.sflag [#allocation4], 1
    %18 = vsyncpa %s17, 0
    loop: start=0, step=1, limit=4
    $region2: #{tpu_custom_call.1} parent=1 // loop_pre_header
      _
    $region3: #{tpu_custom_call.1} parent=1 // loop_header
      %s20 = sphi 0, %s24
      %p21 = scmp.ge.s32.totalorder %s20, 4
      %s30 = sphi 0, %s32
      %s33 = sphi 0, %s30
      %s34 = sphi 0, %s33
      %s50 = sphi 0, %s34
      %s56 = sphi 0, %s58
      %s59 = sphi 0, %s56
      %s60 = sphi 0, %s59
      %s76 = sphi 0, %s60
      %s82 = sphi 0, %s84
      %s85 = sphi 0, %s82
      %s86 = sphi 0, %s85
      %s102 = sphi 0, %s86
      %s106 = sphi 0, %s106
      %s108 = sphi 0, %s106
      %s109 = sphi 0, %s108
      %s123 = sphi 0, %s109
      %s127 = sphi 0, %s127
      %s129 = sphi 0, %s127
      %s130 = sphi 0, %s129
      %s144 = sphi 0, %s130
      %s148 = sphi 0, %s148
      %s150 = sphi 0, %s148
      %s151 = sphi 0, %s150
      %s165 = sphi 0, %s151
      %s169 = sphi 0, %s169
      %s171 = sphi 0, %s169
      %s172 = sphi 0, %s171
      %s186 = sphi 0, %s172
      %s190 = sphi 0, %s190
      %s192 = sphi 0, %s190
      %s193 = sphi 0, %s192
      %s207 = sphi 0, %s193
      %s213 = sphi 0, %s215
      %s216 = sphi 0, %s213
      %s217 = sphi 0, %s216
      %s233 = sphi 0, %s217
    $region4: #{tpu_custom_call.1} parent=1 // loop_header_branch
      %23 = sbr.rel (%p21) target = $region8
    $region5: #{tpu_custom_call.1} parent=1 // loop_body
      %s25 = ssub.s32 %s20, 1
      %s26 = ssub.s32 %s20, 2
      %s27 = sadd.s32 %s20, 1
      %s28 = ssub.s32 %s20, %s27
      %p29 = scmp.eq.s32.totalorder %s28, 0
      %s31 = sadd.s32 %s30, 1
      %s32 = scalar_select %p29, %s30, %s31
      %p35 = pneg %p29
      %p36 = scmp.eq.s32.totalorder %s20, 1
      %p37 = por %p35, %p36
      %p38 = scmp.ne.s32.totalorder %s30, %s33
      %p39 = scmp.eq.s32.totalorder %s20, 0
      %p40 = por %p38, %p39
      %p41 = scmp.ne.s32.totalorder %s30, %s33
      %p42 = scmp.eq.s32.totalorder %s25, 1
      %p43 = por %p41, %p42
      %p44 = scmp.ne.s32.totalorder %s33, %s34
      %p45 = scmp.eq.s32.totalorder %s25, 0
      %p46 = por %p44, %p45
      %p47 = scmp.ne.s32.totalorder %s33, %s34
      %p48 = scmp.eq.s32.totalorder %s26, 1
      %p49 = por %p47, %p48
      %p51 = scmp.ne.s32.totalorder %s34, %s50
      %p52 = scmp.eq.s32.totalorder %s26, 0
      %p53 = por %p51, %p52
      %s54 = ssub.s32 %s20, %s27
      %p55 = scmp.eq.s32.totalorder %s54, 0
      %s57 = sadd.s32 %s56, 1
      %s58 = scalar_select %p55, %s56, %s57
      %p61 = pneg %p55
      %p62 = scmp.eq.s32.totalorder %s20, 1
      %p63 = por %p61, %p62
      %p64 = scmp.ne.s32.totalorder %s56, %s59
      %p65 = scmp.eq.s32.totalorder %s20, 0
      %p66 = por %p64, %p65
      %p67 = scmp.ne.s32.totalorder %s56, %s59
      %p68 = scmp.eq.s32.totalorder %s25, 1
      %p69 = por %p67, %p68
      %p70 = scmp.ne.s32.totalorder %s59, %s60
      %p71 = scmp.eq.s32.totalorder %s25, 0
      %p72 = por %p70, %p71
      %p73 = scmp.ne.s32.totalorder %s59, %s60
      %p74 = scmp.eq.s32.totalorder %s26, 1
      %p75 = por %p73, %p74
      %p77 = scmp.ne.s32.totalorder %s60, %s76
      %p78 = scmp.eq.s32.totalorder %s26, 0
      %p79 = por %p77, %p78
      %s80 = ssub.s32 %s20, %s27
      %p81 = scmp.eq.s32.totalorder %s80, 0
      %s83 = sadd.s32 %s82, 1
      %s84 = scalar_select %p81, %s82, %s83
      %p87 = pneg %p81
      %p88 = scmp.eq.s32.totalorder %s20, 1
      %p89 = por %p87, %p88
      %p90 = scmp.ne.s32.totalorder %s82, %s85
      %p91 = scmp.eq.s32.totalorder %s20, 0
      %p92 = por %p90, %p91
      %p93 = scmp.ne.s32.totalorder %s82, %s85
      %p94 = scmp.eq.s32.totalorder %s25, 1
      %p95 = por %p93, %p94
      %p96 = scmp.ne.s32.totalorder %s85, %s86
      %p97 = scmp.eq.s32.totalorder %s25, 0
      %p98 = por %p96, %p97
      %p99 = scmp.ne.s32.totalorder %s85, %s86
      %p100 = scmp.eq.s32.totalorder %s26, 1
      %p101 = por %p99, %p100
      %p103 = scmp.ne.s32.totalorder %s86, %s102
      %p104 = scmp.eq.s32.totalorder %s26, 0
      %p105 = por %p103, %p104
      %s107 = sadd.s32 %s106, 1
      %p110 = scmp.eq.s32.totalorder %s20, 1
      %p111 = scmp.ne.s32.totalorder %s106, %s108
      %p112 = scmp.eq.s32.totalorder %s20, 0
      %p113 = por %p111, %p112
      %p114 = scmp.ne.s32.totalorder %s106, %s108
      %p115 = scmp.eq.s32.totalorder %s25, 1
      %p116 = por %p114, %p115
      %p117 = scmp.ne.s32.totalorder %s108, %s109
      %p118 = scmp.eq.s32.totalorder %s25, 0
      %p119 = por %p117, %p118
      %p120 = scmp.ne.s32.totalorder %s108, %s109
      %p121 = scmp.eq.s32.totalorder %s26, 1
      %p122 = por %p120, %p121
      %p124 = scmp.ne.s32.totalorder %s109, %s123
      %p125 = scmp.eq.s32.totalorder %s26, 0
      %p126 = por %p124, %p125
      %s128 = sadd.s32 %s127, 1
      %p131 = scmp.eq.s32.totalorder %s20, 1
      %p132 = scmp.ne.s32.totalorder %s127, %s129
      %p133 = scmp.eq.s32.totalorder %s20, 0
      %p134 = por %p132, %p133
      %p135 = scmp.ne.s32.totalorder %s127, %s129
      %p136 = scmp.eq.s32.totalorder %s25, 1
      %p137 = por %p135, %p136
      %p138 = scmp.ne.s32.totalorder %s129, %s130
      %p139 = scmp.eq.s32.totalorder %s25, 0
      %p140 = por %p138, %p139
      %p141 = scmp.ne.s32.totalorder %s129, %s130
      %p142 = scmp.eq.s32.totalorder %s26, 1
      %p143 = por %p141, %p142
      %p145 = scmp.ne.s32.totalorder %s130, %s144
      %p146 = scmp.eq.s32.totalorder %s26, 0
      %p147 = por %p145, %p146
      %s149 = sadd.s32 %s148, 1
      %p152 = scmp.eq.s32.totalorder %s20, 1
      %p153 = scmp.ne.s32.totalorder %s148, %s150
      %p154 = scmp.eq.s32.totalorder %s20, 0
      %p155 = por %p153, %p154
      %p156 = scmp.ne.s32.totalorder %s148, %s150
      %p157 = scmp.eq.s32.totalorder %s25, 1
      %p158 = por %p156, %p157
      %p159 = scmp.ne.s32.totalorder %s150, %s151
      %p160 = scmp.eq.s32.totalorder %s25, 0
      %p161 = por %p159, %p160
      %p162 = scmp.ne.s32.totalorder %s150, %s151
      %p163 = scmp.eq.s32.totalorder %s26, 1
      %p164 = por %p162, %p163
      %p166 = scmp.ne.s32.totalorder %s151, %s165
      %p167 = scmp.eq.s32.totalorder %s26, 0
      %p168 = por %p166, %p167
      %s170 = sadd.s32 %s169, 1
      %p173 = scmp.eq.s32.totalorder %s20, 1
      %p174 = scmp.ne.s32.totalorder %s169, %s171
      %p175 = scmp.eq.s32.totalorder %s20, 0
      %p176 = por %p174, %p175
      %p177 = scmp.ne.s32.totalorder %s169, %s171
      %p178 = scmp.eq.s32.totalorder %s25, 1
      %p179 = por %p177, %p178
      %p180 = scmp.ne.s32.totalorder %s171, %s172
      %p181 = scmp.eq.s32.totalorder %s25, 0
      %p182 = por %p180, %p181
      %p183 = scmp.ne.s32.totalorder %s171, %s172
      %p184 = scmp.eq.s32.totalorder %s26, 1
      %p185 = por %p183, %p184
      %p187 = scmp.ne.s32.totalorder %s172, %s186
      %p188 = scmp.eq.s32.totalorder %s26, 0
      %p189 = por %p187, %p188
      %s191 = sadd.s32 %s190, 1
      %p194 = scmp.eq.s32.totalorder %s20, 1
      %p195 = scmp.ne.s32.totalorder %s190, %s192
      %p196 = scmp.eq.s32.totalorder %s20, 0
      %p197 = por %p195, %p196
      %p198 = scmp.ne.s32.totalorder %s190, %s192
      %p199 = scmp.eq.s32.totalorder %s25, 1
      %p200 = por %p198, %p199
      %p201 = scmp.ne.s32.totalorder %s192, %s193
      %p202 = scmp.eq.s32.totalorder %s25, 0
      %p203 = por %p201, %p202
      %p204 = scmp.ne.s32.totalorder %s192, %s193
      %p205 = scmp.eq.s32.totalorder %s26, 1
      %p206 = por %p204, %p205
      %p208 = scmp.ne.s32.totalorder %s193, %s207
      %p209 = scmp.eq.s32.totalorder %s26, 0
      %p210 = por %p208, %p209
      %s211 = ssub.s32 %s20, %s27
      %p212 = scmp.eq.s32.totalorder %s211, 0
      %s214 = sadd.s32 %s213, 1
      %s215 = scalar_select %p212, %s213, %s214
      %p218 = pneg %p212
      %p219 = scmp.eq.s32.totalorder %s20, 1
      %p220 = por %p218, %p219
      %p221 = scmp.ne.s32.totalorder %s213, %s216
      %p222 = scmp.eq.s32.totalorder %s20, 0
      %p223 = por %p221, %p222
      %p224 = scmp.ne.s32.totalorder %s213, %s216
      %p225 = scmp.eq.s32.totalorder %s25, 1
      %p226 = por %p224, %p225
      %p227 = scmp.ne.s32.totalorder %s216, %s217
      %p228 = scmp.eq.s32.totalorder %s25, 0
      %p229 = por %p227, %p228
      %p230 = scmp.ne.s32.totalorder %s216, %s217
      %p231 = scmp.eq.s32.totalorder %s26, 1
      %p232 = por %p230, %p231
      %p234 = scmp.ne.s32.totalorder %s217, %s233
      %p235 = scmp.eq.s32.totalorder %s26, 0
      %p236 = por %p234, %p235
      %p237 = scmp.le.s32.totalorder 1, %s20
      %p238 = scmp.lt.s32.totalorder %s20, 3
      %p239 = pnand %p237, %p238
      %p240 = pneg %p239
      // Predicated region
      $region9: #{tpu_custom_call.1} parent=5 // pred_check
        _
      $region10: #{tpu_custom_call.1} parent=5 // pred_check_branch
        %242 = sbr.rel (%p239) target = $region12
      $region11: #{tpu_custom_call.1} parent=5 // pred_region
        %s243 = ssub.s32 %s20, 1
        // Predicated region
        $region13: #{tpu_custom_call.1} parent=11 // pred_check
          %p244 = pneg %p119
        $region14: #{tpu_custom_call.1} parent=11 // pred_check_branch
          %246 = sbr.rel (%p244) target = $region16
        $region15: #{tpu_custom_call.1} parent=11 // pred_region
          _
        $region16: #{tpu_custom_call.1} parent=11 // pred_fallthru
          _
        // Predicated region
        $region17: #{tpu_custom_call.1} parent=11 // pred_check
          %p247 = pneg %p140
        $region18: #{tpu_custom_call.1} parent=11 // pred_check_branch
          %249 = sbr.rel (%p247) target = $region20
        $region19: #{tpu_custom_call.1} parent=11 // pred_region
          _
        $region20: #{tpu_custom_call.1} parent=11 // pred_fallthru
          _
        // Predicated region
        $region21: #{tpu_custom_call.1} parent=11 // pred_check
          %p250 = pneg %p161
        $region22: #{tpu_custom_call.1} parent=11 // pred_check_branch
          %252 = sbr.rel (%p250) target = $region24
        $region23: #{tpu_custom_call.1} parent=11 // pred_region
          _
        $region24: #{tpu_custom_call.1} parent=11 // pred_fallthru
          _
        // Predicated region
        $region25: #{tpu_custom_call.1} parent=11 // pred_check
          %p253 = pneg %p182
        $region26: #{tpu_custom_call.1} parent=11 // pred_check_branch
          %255 = sbr.rel (%p253) target = $region28
        $region27: #{tpu_custom_call.1} parent=11 // pred_region
          _
        $region28: #{tpu_custom_call.1} parent=11 // pred_fallthru
          _
        // Predicated region
        $region29: #{tpu_custom_call.1} parent=11 // pred_check
          %p256 = pneg %p203
        $region30: #{tpu_custom_call.1} parent=11 // pred_check_branch
          %258 = sbr.rel (%p256) target = $region32
        $region31: #{tpu_custom_call.1} parent=11 // pred_region
          _
        $region32: #{tpu_custom_call.1} parent=11 // pred_fallthru
          _
      $region12: #{tpu_custom_call.1} parent=5 // pred_fallthru
        _
      %p259 = scmp.lt.s32.totalorder %s20, 2
      // Predicated region
      $region33: #{tpu_custom_call.1} parent=5 // pred_check
        %p260 = pneg %p259
      $region34: #{tpu_custom_call.1} parent=5 // pred_check_branch
        %262 = sbr.rel (%p260) target = $region36
      $region35: #{tpu_custom_call.1} parent=5 // pred_region
        // Predicated region
        $region37: #{tpu_custom_call.1} parent=35 // pred_check
          %p263 = pneg %p40
        $region38: #{tpu_custom_call.1} parent=35 // pred_check_branch
          %265 = sbr.rel (%p263) target = $region40
        $region39: #{tpu_custom_call.1} parent=35 // pred_region
          %s266 = sand.u32 %s30, 1
          %s267 = scalar_lea.sflag [#allocation3], %s266
          %s268 = sand.u32 %s30, 1
          %s269 = smul.addr %s268, 32
          %s270 = scalar_lea.vmem [#allocation2], %s269
          %272 = vsyncadd %s267, 0
          %s273 = smul.addr %s20, 4
          %s274 = smul.addr %s273, 8
          %s275 = scalar_lea.hbm %s0, %s274
          %s277 = sshll.u32 %s275, 4
          %s278 = int_to_ptr.hbm [resolvable:$true] %s277
          %s279 = sshll.u32 %s270, 4
          %s280 = int_to_ptr.vmem [resolvable:$true] %s279
          %282 = dma.hbm_to_vmem [thread:$0]  %s278, 512, %s280, %s267
        $region40: #{tpu_custom_call.1} parent=35 // pred_fallthru
          _
        // Predicated region
        $region41: #{tpu_custom_call.1} parent=35 // pred_check
          %p283 = pneg %p66
        $region42: #{tpu_custom_call.1} parent=35 // pred_check_branch
          %285 = sbr.rel (%p283) target = $region44
        $region43: #{tpu_custom_call.1} parent=35 // pred_region
          %p286 = scmp.lt.s32.totalorder %s20, 1
          %s287 = scalar_select %p286, %s20, 1
          %s288 = smul.addr %s287, 8
          %s289 = scalar_lea.vmem %s1, %s288
        $region44: #{tpu_custom_call.1} parent=35 // pred_fallthru
          _
        // Predicated region
        $region45: #{tpu_custom_call.1} parent=35 // pred_check
          %p290 = pneg %p92
        $region46: #{tpu_custom_call.1} parent=35 // pred_check_branch
          %292 = sbr.rel (%p290) target = $region48
        $region47: #{tpu_custom_call.1} parent=35 // pred_region
          %p293 = scmp.lt.s32.totalorder %s20, 1
          %s294 = scalar_select %p293, %s20, 1
          %s295 = smul.addr %s294, 8
          %s296 = scalar_lea.vmem %s2, %s295
        $region48: #{tpu_custom_call.1} parent=35 // pred_fallthru
          _
      $region36: #{tpu_custom_call.1} parent=5 // pred_fallthru
        _
      %p297 = scmp.le.s32.totalorder 1, %s20
      %p298 = scmp.lt.s32.totalorder %s20, 3
      %p299 = pnand %p297, %p298
      %p300 = pneg %p299
      // Predicated region
      $region49: #{tpu_custom_call.1} parent=5 // pred_check
        _
      $region50: #{tpu_custom_call.1} parent=5 // pred_check_branch
        %302 = sbr.rel (%p299) target = $region52
      $region51: #{tpu_custom_call.1} parent=5 // pred_region
        %s303 = ssub.s32 %s20, 1
        %s304 = sand.u32 %s33, 1
        %s305 = scalar_lea.sflag [#allocation3], %s304
        %s306 = sand.u32 %s33, 1
        %s307 = smul.addr %s306, 32
        %s308 = scalar_lea.vmem [#allocation2], %s307
        // Predicated region
        $region53: #{tpu_custom_call.1} parent=51 // pred_check
          %p309 = pneg %p46
        $region54: #{tpu_custom_call.1} parent=51 // pred_check_branch
          %311 = sbr.rel (%p309) target = $region56
        $region55: #{tpu_custom_call.1} parent=51 // pred_region
          %313 = dma.done %s305, 512
        $region56: #{tpu_custom_call.1} parent=51 // pred_fallthru
          _
        %s314 = sand.u32 %s33, 1
        %s315 = scalar_lea.sflag [#allocation3], %s314
        %s316 = sand.u32 %s33, 1
        %s317 = smul.addr %s316, 32
        %s318 = scalar_lea.vmem [#allocation2], %s317
        %p319 = pneg %p46
        %p320 = pneg %p43
        %p321 = scmp.lt.s32.totalorder %s25, 1
        %s322 = scalar_select %p321, %s25, 1
        %s323 = smul.addr %s322, 8
        %s324 = scalar_lea.vmem %s1, %s323
        %p325 = pneg %p72
        %p326 = pneg %p69
        %p327 = scmp.lt.s32.totalorder %s25, 1
        %s328 = scalar_select %p327, %s25, 1
        %s329 = smul.addr %s328, 8
        %s330 = scalar_lea.vmem %s2, %s329
        %p331 = pneg %p98
        %p332 = pneg %p95
        %p333 = pneg %p119
        %p334 = pneg %p116
        %p335 = pneg %p140
        %p336 = pneg %p137
        %p337 = pneg %p161
        %p338 = pneg %p158
        %p339 = pneg %p182
        %p340 = pneg %p179
        %p341 = pneg %p203
        %p342 = pneg %p200
        %p343 = pneg %p229
        %p344 = pneg %p226
        %s345 = sand.u32 %s216, 1
        %s346 = scalar_lea.sflag [#allocation4], %s345
        %s347 = sand.u32 %s216, 1
        %s348 = smul.addr %s347, 24
        %s349 = scalar_lea.vmem [#allocation5], %s348
        %p350 = scmp.lt.s32.totalorder %s25, 1
        %s351 = scalar_select %p350, %s25, 1
        %s352 = smul.addr %s351, 8
        %s353 = scalar_lea.vmem %s1, %s352
        %p354 = scmp.lt.s32.totalorder %s25, 1
        %s355 = scalar_select %p354, %s25, 1
        %s356 = smul.addr %s355, 8
        %s357 = scalar_lea.vmem %s2, %s356
        %v358 = vld [vmem:[%s308] sm:$0xff]
        %v359 = vld [vmem:[%s308 + $0x8] sm:$0xff]
        %v360 = vld [vmem:[%s308 + $0x10] sm:$0xff]
        %v361 = vld [vmem:[%s308 + $0x18] sm:$0xff]
        %v362 = vld [vmem:[%s3] sm:$0xff]
        %v367 = vrot.slane %v358, 4
        %v368 = vrot.slane %v359, 4
        %v369 = vrot.slane %v360, 4
        %v370 = vrot.slane %v361, 4
        %371 = vrot.lane.b32.xlu0 %v367, 127
        %v372 = vpop.permute.xlu0 %371
        %373 = vrot.lane.b32.xlu0 %v368, 127
        %v374 = vpop.permute.xlu0 %373
        %375 = vrot.lane.b32.xlu0 %v369, 127
        %v376 = vpop.permute.xlu0 %375
        %377 = vrot.lane.b32.xlu0 %v370, 127
        %v378 = vpop.permute.xlu0 %377
        %vm379 = vcmask 1039360
        %v380 = vsel %vm379, %v372, %v374
        %v381 = vsel %vm379, %v374, %v376
        %v382 = vsel %vm379, %v376, %v378
        %386 = vrot.lane.b32.xlu0 %v358, 126
        %v387 = vpop.permute.xlu0 %386
        %388 = vrot.lane.b32.xlu0 %v359, 126
        %v389 = vpop.permute.xlu0 %388
        %390 = vrot.lane.b32.xlu0 %v360, 126
        %v391 = vpop.permute.xlu0 %390
        %392 = vrot.lane.b32.xlu0 %v361, 126
        %v393 = vpop.permute.xlu0 %392
        %vm394 = vcmask 1031168
        %v395 = vsel %vm394, %v387, %v389
        %v396 = vsel %vm394, %v389, %v391
        %v397 = vsel %vm394, %v391, %v393
        %401 = vrot.lane.b32.xlu0 %v367, 110
        %v402 = vpop.permute.xlu0 %401
        %403 = vrot.lane.b32.xlu0 %v368, 110
        %v404 = vpop.permute.xlu0 %403
        %405 = vrot.lane.b32.xlu0 %v369, 110
        %v406 = vpop.permute.xlu0 %405
        %407 = vrot.lane.b32.xlu0 %v370, 110
        %v408 = vpop.permute.xlu0 %407
        %vm409 = vcmask 900096
        %v410 = vsel %vm409, %v402, %v404
        %v411 = vsel %vm409, %v404, %v406
        %v412 = vsel %vm409, %v406, %v408
        %416 = vrot.lane.b32.xlu0 %v358, 109
        %v417 = vpop.permute.xlu0 %416
        %418 = vrot.lane.b32.xlu0 %v359, 109
        %v419 = vpop.permute.xlu0 %418
        %420 = vrot.lane.b32.xlu0 %v360, 109
        %v421 = vpop.permute.xlu0 %420
        %422 = vrot.lane.b32.xlu0 %v361, 109
        %v423 = vpop.permute.xlu0 %422
        %vm424 = vcmask 891904
        %v425 = vsel %vm424, %v417, %v419
        %v426 = vsel %vm424, %v419, %v421
        %v427 = vsel %vm424, %v421, %v423
        %431 = vrot.lane.b32.xlu0 %v367, 108
        %v432 = vpop.permute.xlu0 %431
        %433 = vrot.lane.b32.xlu0 %v368, 108
        %v434 = vpop.permute.xlu0 %433
        %435 = vrot.lane.b32.xlu0 %v369, 108
        %v436 = vpop.permute.xlu0 %435
        %437 = vrot.lane.b32.xlu0 %v370, 108
        %v438 = vpop.permute.xlu0 %437
        %vm439 = vcmask 883712
        %v440 = vsel %vm439, %v432, %v434
        %v441 = vsel %vm439, %v434, %v436
        %v442 = vsel %vm439, %v436, %v438
        %vm446 = vcmask 1043456
        %v447 = vsel %vm446, %v358, %v380
        %v448 = vsel %vm446, %v359, %v381
        %v449 = vsel %vm446, %v360, %v382
        %v450 = vsel %vm446, %v395, %v410
        %v451 = vsel %vm446, %v396, %v411
        %v452 = vsel %vm446, %v397, %v412
        %v453 = vsel %vm446, %v425, %v440
        %v454 = vsel %vm446, %v426, %v441
        %v455 = vsel %vm446, %v427, %v442
        %v456 = vld [vmem:[%s353] sm:$0xff]
        %458 = vset.pattern.permute.xlu0 0
        %459 = vperm.xlu0 %458, %v456
        %v460 = vpop.permute.xlu0 %459
        %vm462 = vcmask 195584
        %v464 = vsel %vm462, %v362, 0
        %466 = vmatpush.msra.mxu0 0.0
        %467 = vmatpush.msra.mxu0 0.0
        %468 = vmatpush.msra.mxu0 0.0
        %469 = vmatpush.msra.mxu0 0.0
        %470 = vmatpush.msra.mxu0 0.0
        %471 = vmatpush.msra.mxu0 0.0
        %472 = vmatpush.msra.mxu0 0.0
        %473 = vmatpush.msra.mxu0 0.0
        %474 = vmatpush.msra.mxu0 0.0
        %475 = vmatpush.msra.mxu0 0.0
        %476 = vmatpush.msra.mxu0 0.0
        %477 = vmatpush.msra.mxu0 0.0
        %478 = vmatpush.msra.mxu0 0.0
        %479 = vmatpush.msra.mxu0 %v453
        %480 = vmatpush.msra.mxu0 %v450
        %481 = vmatpush.msra.mxu0 %v447
        %482 = vmatmul.f32.gmra.mxu0 %v464
        %v483 = vpop.f32.mrf.mxu0
        %v484 = vadd.f32 %v460, %v483
        %485 = vdwg.mxu0
        %486 = vmatpush.msra.mxu0 0.0
        %487 = vmatpush.msra.mxu0 0.0
        %488 = vmatpush.msra.mxu0 0.0
        %489 = vmatpush.msra.mxu0 0.0
        %490 = vmatpush.msra.mxu0 0.0
        %491 = vmatpush.msra.mxu0 0.0
        %492 = vmatpush.msra.mxu0 0.0
        %493 = vmatpush.msra.mxu0 0.0
        %494 = vmatpush.msra.mxu0 0.0
        %495 = vmatpush.msra.mxu0 0.0
        %496 = vmatpush.msra.mxu0 0.0
        %497 = vmatpush.msra.mxu0 0.0
        %498 = vmatpush.msra.mxu0 0.0
        %499 = vmatpush.msra.mxu0 %v454
        %500 = vmatpush.msra.mxu0 %v451
        %501 = vmatpush.msra.mxu0 %v448
        %502 = vmatmul.f32.gmra.mxu0 %v464
        %v503 = vpop.f32.mrf.mxu0
        %v504 = vadd.f32 %v460, %v503
        %505 = vdwg.mxu0
        %506 = vmatpush.msra.mxu0 0.0
        %507 = vmatpush.msra.mxu0 0.0
        %508 = vmatpush.msra.mxu0 0.0
        %509 = vmatpush.msra.mxu0 0.0
        %510 = vmatpush.msra.mxu0 0.0
        %511 = vmatpush.msra.mxu0 0.0
        %512 = vmatpush.msra.mxu0 0.0
        %513 = vmatpush.msra.mxu0 0.0
        %514 = vmatpush.msra.mxu0 0.0
        %515 = vmatpush.msra.mxu0 0.0
        %516 = vmatpush.msra.mxu0 0.0
        %517 = vmatpush.msra.mxu0 0.0
        %518 = vmatpush.msra.mxu0 0.0
        %519 = vmatpush.msra.mxu0 %v455
        %520 = vmatpush.msra.mxu0 %v452
        %521 = vmatpush.msra.mxu0 %v449
        %522 = vmatmul.f32.gmra.mxu0 %v464
        %v523 = vpop.f32.mrf.mxu0
        %v524 = vadd.f32 %v460, %v523
        %525 = vdwg.mxu0
        %v526 = vld [vmem:[%s4] sm:$0xff]
        %531 = vrot.lane.b32.xlu0 %v358, 127
        %v532 = vpop.permute.xlu0 %531
        %533 = vrot.lane.b32.xlu0 %v359, 127
        %v534 = vpop.permute.xlu0 %533
        %535 = vrot.lane.b32.xlu0 %v360, 127
        %v536 = vpop.permute.xlu0 %535
        %537 = vrot.lane.b32.xlu0 %v361, 127
        %v538 = vpop.permute.xlu0 %537
        %v539 = vsel %vm379, %v532, %v534
        %v540 = vsel %vm379, %v534, %v536
        %v541 = vsel %vm379, %v536, %v538
        %v546 = vsel %vm446, %v367, %v539
        %v547 = vsel %vm446, %v368, %v540
        %v548 = vsel %vm446, %v369, %v541
        %v549 = vsel %vm446, %v370, %v538
        %v550 = vld [vmem:[%s5] sm:$0xff]
        %vm551 = vcmask 64512
        %v553 = vsel %vm551, %v550, 0
        %555 = vmatpush.msra.mxu0 0.0
        %556 = vmatpush.msra.mxu0 0.0
        %557 = vmatpush.msra.mxu0 0.0
        %558 = vmatpush.msra.mxu0 0.0
        %559 = vmatpush.msra.mxu0 0.0
        %560 = vmatpush.msra.mxu0 0.0
        %561 = vmatpush.msra.mxu0 0.0
        %562 = vmatpush.msra.mxu0 0.0
        %563 = vmatpush.msra.mxu0 0.0
        %564 = vmatpush.msra.mxu0 0.0
        %565 = vmatpush.msra.mxu0 0.0
        %566 = vmatpush.msra.mxu0 0.0
        %567 = vmatpush.msra.mxu0 0.0
        %568 = vmatpush.msra.mxu0 0.0
        %569 = vmatpush.msra.mxu0 0.0
        %570 = vmatpush.msra.mxu0 %v484
        %571 = vmatmul.f32.gmra.mxu0 %v553
        %v572 = vpop.f32.mrf.mxu0
        %v573 = vadd.f32 0.0, %v572
        %574 = vdwg.mxu0
        %575 = vmatpush.msra.mxu0 0.0
        %576 = vmatpush.msra.mxu0 0.0
        %577 = vmatpush.msra.mxu0 0.0
        %578 = vmatpush.msra.mxu0 0.0
        %579 = vmatpush.msra.mxu0 0.0
        %580 = vmatpush.msra.mxu0 0.0
        %581 = vmatpush.msra.mxu0 0.0
        %582 = vmatpush.msra.mxu0 0.0
        %583 = vmatpush.msra.mxu0 0.0
        %584 = vmatpush.msra.mxu0 0.0
        %585 = vmatpush.msra.mxu0 0.0
        %586 = vmatpush.msra.mxu0 0.0
        %587 = vmatpush.msra.mxu0 0.0
        %588 = vmatpush.msra.mxu0 0.0
        %589 = vmatpush.msra.mxu0 0.0
        %590 = vmatpush.msra.mxu0 %v504
        %591 = vmatmul.f32.gmra.mxu0 %v553
        %v592 = vpop.f32.mrf.mxu0
        %v593 = vadd.f32 0.0, %v592
        %594 = vdwg.mxu0
        %595 = vmatpush.msra.mxu0 0.0
        %596 = vmatpush.msra.mxu0 0.0
        %597 = vmatpush.msra.mxu0 0.0
        %598 = vmatpush.msra.mxu0 0.0
        %599 = vmatpush.msra.mxu0 0.0
        %600 = vmatpush.msra.mxu0 0.0
        %601 = vmatpush.msra.mxu0 0.0
        %602 = vmatpush.msra.mxu0 0.0
        %603 = vmatpush.msra.mxu0 0.0
        %604 = vmatpush.msra.mxu0 0.0
        %605 = vmatpush.msra.mxu0 0.0
        %606 = vmatpush.msra.mxu0 0.0
        %607 = vmatpush.msra.mxu0 0.0
        %608 = vmatpush.msra.mxu0 0.0
        %609 = vmatpush.msra.mxu0 0.0
        %610 = vmatpush.msra.mxu0 %v524
        %611 = vmatmul.f32.gmra.mxu0 %v553
        %v612 = vpop.f32.mrf.mxu0
        %v613 = vadd.f32 0.0, %v612
        %614 = vdwg.mxu0
        %619 = vrot.lane.b32.xlu0 %v546, 110
        %v620 = vpop.permute.xlu0 %619
        %621 = vrot.lane.b32.xlu0 %v547, 110
        %v622 = vpop.permute.xlu0 %621
        %623 = vrot.lane.b32.xlu0 %v548, 110
        %v624 = vpop.permute.xlu0 %623
        %625 = vrot.lane.b32.xlu0 %v549, 110
        %v626 = vpop.permute.xlu0 %625
        %v627 = vsel %vm409, %v620, %v622
        %v628 = vsel %vm409, %v622, %v624
        %v629 = vsel %vm409, %v624, %v626
        %v634 = vsel %vm551, %v526, 0
        %636 = vmatpush.msra.mxu0 0.0
        %637 = vmatpush.msra.mxu0 0.0
        %638 = vmatpush.msra.mxu0 0.0
        %639 = vmatpush.msra.mxu0 0.0
        %640 = vmatpush.msra.mxu0 0.0
        %641 = vmatpush.msra.mxu0 0.0
        %642 = vmatpush.msra.mxu0 0.0
        %643 = vmatpush.msra.mxu0 0.0
        %644 = vmatpush.msra.mxu0 0.0
        %645 = vmatpush.msra.mxu0 0.0
        %646 = vmatpush.msra.mxu0 0.0
        %647 = vmatpush.msra.mxu0 0.0
        %648 = vmatpush.msra.mxu0 0.0
        %649 = vmatpush.msra.mxu0 0.0
        %650 = vmatpush.msra.mxu0 0.0
        %651 = vmatpush.msra.mxu0 %v627
        %652 = vmatmul.f32.gmra.mxu0 %v634
        %v653 = vpop.f32.mrf.mxu0
        %v654 = vadd.f32 %v573, %v653
        %655 = vdwg.mxu0
        %656 = vmatpush.msra.mxu0 0.0
        %657 = vmatpush.msra.mxu0 0.0
        %658 = vmatpush.msra.mxu0 0.0
        %659 = vmatpush.msra.mxu0 0.0
        %660 = vmatpush.msra.mxu0 0.0
        %661 = vmatpush.msra.mxu0 0.0
        %662 = vmatpush.msra.mxu0 0.0
        %663 = vmatpush.msra.mxu0 0.0
        %664 = vmatpush.msra.mxu0 0.0
        %665 = vmatpush.msra.mxu0 0.0
        %666 = vmatpush.msra.mxu0 0.0
        %667 = vmatpush.msra.mxu0 0.0
        %668 = vmatpush.msra.mxu0 0.0
        %669 = vmatpush.msra.mxu0 0.0
        %670 = vmatpush.msra.mxu0 0.0
        %671 = vmatpush.msra.mxu0 %v628
        %672 = vmatmul.f32.gmra.mxu0 %v634
        %v673 = vpop.f32.mrf.mxu0
        %v674 = vadd.f32 %v593, %v673
        %675 = vdwg.mxu0
        %676 = vmatpush.msra.mxu0 0.0
        %677 = vmatpush.msra.mxu0 0.0
        %678 = vmatpush.msra.mxu0 0.0
        %679 = vmatpush.msra.mxu0 0.0
        %680 = vmatpush.msra.mxu0 0.0
        %681 = vmatpush.msra.mxu0 0.0
        %682 = vmatpush.msra.mxu0 0.0
        %683 = vmatpush.msra.mxu0 0.0
        %684 = vmatpush.msra.mxu0 0.0
        %685 = vmatpush.msra.mxu0 0.0
        %686 = vmatpush.msra.mxu0 0.0
        %687 = vmatpush.msra.mxu0 0.0
        %688 = vmatpush.msra.mxu0 0.0
        %689 = vmatpush.msra.mxu0 0.0
        %690 = vmatpush.msra.mxu0 0.0
        %691 = vmatpush.msra.mxu0 %v629
        %692 = vmatmul.f32.gmra.mxu0 %v634
        %v693 = vpop.f32.mrf.mxu0
        %v694 = vadd.f32 %v613, %v693
        %695 = vdwg.mxu0
        %v696 = vld [vmem:[%s357] sm:$0xff]
        %698 = vset.pattern.permute.xlu0 0
        %699 = vperm.xlu0 %698, %v696
        %v700 = vpop.permute.xlu0 %699
        %v702 = vadd.f32 %v654, %v700
        %v703 = vadd.f32 %v674, %v700
        %v704 = vadd.f32 %v694, %v700
        %v705 = vtanh.pop %v484
        %v706 = vtanh.pop %v504
        %v707 = vtanh.pop %v524
        %v708 = vmul.f32 %v484, 0.5
        %v709 = vmul.f32 %v504, 0.5
        %v710 = vmul.f32 %v524, 0.5
        %v711 = vtanh.pop %v708
        %v712 = vtanh.pop %v709
        %v713 = vtanh.pop %v710
        %v714 = vmul.f32 %v711, 0.5
        %v715 = vmul.f32 %v712, 0.5
        %v716 = vmul.f32 %v713, 0.5
        %v717 = vadd.f32 %v714, 0.5
        %v718 = vadd.f32 %v715, 0.5
        %v719 = vadd.f32 %v716, 0.5
        %v723 = vrot.slane %v717, 4
        %v724 = vrot.slane %v718, 4
        %v725 = vrot.slane %v719, 4
        %v729 = vmul.f32 %v705, %v723
        %v730 = vmul.f32 %v706, %v724
        %v731 = vmul.f32 %v707, %v725
        %v732 = vtanh.pop %v702
        %v733 = vtanh.pop %v703
        %v734 = vtanh.pop %v704
        %v735 = vmul.f32 %v702, 0.5
        %v736 = vmul.f32 %v703, 0.5
        %v737 = vmul.f32 %v704, 0.5
        %v738 = vtanh.pop %v735
        %v739 = vtanh.pop %v736
        %v740 = vtanh.pop %v737
        %v741 = vmul.f32 %v738, 0.5
        %v742 = vmul.f32 %v739, 0.5
        %v743 = vmul.f32 %v740, 0.5
        %v744 = vadd.f32 %v741, 0.5
        %v745 = vadd.f32 %v742, 0.5
        %v746 = vadd.f32 %v743, 0.5
        %v750 = vrot.slane %v744, 4
        %v751 = vrot.slane %v745, 4
        %v752 = vrot.slane %v746, 4
        %v756 = vmul.f32 %v732, %v750
        %v757 = vmul.f32 %v733, %v751
        %v758 = vmul.f32 %v734, %v752
        %v759 = vld [vmem:[%s6] sm:$0xf]
        %v760 = vld [vmem:[%s7] sm:$0xf]
        %762 = vset.pattern.permute.xlu0 0
        %763 = vperm.xlu0 %762, %v760
        %v764 = vpop.permute.xlu0 %763
        %vm766 = vcmask 31744
        %v768 = vsel %vm766, %v759, 0
        %v771 = vsel %vm446, %v756, 0
        %v774 = vsel %vm446, %v757, 0
        %v777 = vsel %vm446, %v758, 0
        %779 = vmatpush.msra.mxu0 0.0
        %780 = vmatpush.msra.mxu0 0.0
        %781 = vmatpush.msra.mxu0 0.0
        %782 = vmatpush.msra.mxu0 0.0
        %783 = vmatpush.msra.mxu0 0.0
        %784 = vmatpush.msra.mxu0 0.0
        %785 = vmatpush.msra.mxu0 0.0
        %786 = vmatpush.msra.mxu0 0.0
        %787 = vmatpush.msra.mxu0 0.0
        %788 = vmatpush.msra.mxu0 0.0
        %789 = vmatpush.msra.mxu0 0.0
        %790 = vmatpush.msra.mxu0 0.0
        %791 = vmatpush.msra.mxu0 0.0
        %792 = vmatpush.msra.mxu0 0.0
        %793 = vmatpush.msra.mxu0 0.0
        %794 = vmatpush.msra.mxu0 %v771
        %795 = vmatmul.f32.gmra.mxu0 %v768
        %v796 = vpop.f32.mrf.mxu0
        %v797 = vadd.f32 %v764, %v796
        %798 = vdwg.mxu0
        %799 = vmatpush.msra.mxu0 0.0
        %800 = vmatpush.msra.mxu0 0.0
        %801 = vmatpush.msra.mxu0 0.0
        %802 = vmatpush.msra.mxu0 0.0
        %803 = vmatpush.msra.mxu0 0.0
        %804 = vmatpush.msra.mxu0 0.0
        %805 = vmatpush.msra.mxu0 0.0
        %806 = vmatpush.msra.mxu0 0.0
        %807 = vmatpush.msra.mxu0 0.0
        %808 = vmatpush.msra.mxu0 0.0
        %809 = vmatpush.msra.mxu0 0.0
        %810 = vmatpush.msra.mxu0 0.0
        %811 = vmatpush.msra.mxu0 0.0
        %812 = vmatpush.msra.mxu0 0.0
        %813 = vmatpush.msra.mxu0 0.0
        %814 = vmatpush.msra.mxu0 %v774
        %815 = vmatmul.f32.gmra.mxu0 %v768
        %v816 = vpop.f32.mrf.mxu0
        %v817 = vadd.f32 %v764, %v816
        %818 = vdwg.mxu0
        %819 = vmatpush.msra.mxu0 0.0
        %820 = vmatpush.msra.mxu0 0.0
        %821 = vmatpush.msra.mxu0 0.0
        %822 = vmatpush.msra.mxu0 0.0
        %823 = vmatpush.msra.mxu0 0.0
        %824 = vmatpush.msra.mxu0 0.0
        %825 = vmatpush.msra.mxu0 0.0
        %826 = vmatpush.msra.mxu0 0.0
        %827 = vmatpush.msra.mxu0 0.0
        %828 = vmatpush.msra.mxu0 0.0
        %829 = vmatpush.msra.mxu0 0.0
        %830 = vmatpush.msra.mxu0 0.0
        %831 = vmatpush.msra.mxu0 0.0
        %832 = vmatpush.msra.mxu0 0.0
        %833 = vmatpush.msra.mxu0 0.0
        %834 = vmatpush.msra.mxu0 %v777
        %835 = vmatmul.f32.gmra.mxu0 %v768
        %v836 = vpop.f32.mrf.mxu0
        %v837 = vadd.f32 %v764, %v836
        %838 = vdwg.mxu0
        %839 = vrot.lane.b32.xlu0 %v367, 109
        %v840 = vpop.permute.xlu0 %839
        %841 = vrot.lane.b32.xlu0 %v368, 109
        %v842 = vpop.permute.xlu0 %841
        %843 = vrot.lane.b32.xlu0 %v369, 109
        %v844 = vpop.permute.xlu0 %843
        %845 = vrot.lane.b32.xlu0 %v370, 109
        %v846 = vpop.permute.xlu0 %845
        %v847 = vsel %vm424, %v840, %v842
        %v848 = vsel %vm424, %v842, %v844
        %v849 = vsel %vm424, %v844, %v846
        %v853 = vadd.f32 %v797, %v847
        %v854 = vadd.f32 %v817, %v848
        %v855 = vadd.f32 %v837, %v849
        %v859 = vrot.slane %v853, 4
        %v860 = vrot.slane %v854, 4
        %v861 = vrot.slane %v855, 4
        %v865 = vsel %vm446, %v729, %v859
        %v866 = vsel %vm446, %v730, %v860
        %v867 = vsel %vm446, %v731, %v861
        %868 = vst [vmem:[%s349] sm:$0xff] %v865
        %869 = vst [vmem:[%s349 + $0x8] sm:$0xff] %v866
        %870 = vst [vmem:[%s349 + $0x10] sm:$0xff] %v867
        %s871 = sand.u32 %s216, 1
        %s872 = scalar_lea.sflag [#allocation4], %s871
        %s873 = sand.u32 %s216, 1
        %s874 = smul.addr %s873, 24
        %s875 = scalar_lea.vmem [#allocation5], %s874
        // Predicated region
        $region57: #{tpu_custom_call.1} parent=51 // pred_check
          %p876 = pneg %p226
        $region58: #{tpu_custom_call.1} parent=51 // pred_check_branch
          %878 = sbr.rel (%p876) target = $region60
        $region59: #{tpu_custom_call.1} parent=51 // pred_region
          %880 = vsyncadd %s872, 0
          %s881 = smul.addr %s25, 3
          %s882 = smul.addr %s881, 8
          %s883 = scalar_lea.hbm %s8, %s882
          %s885 = sshll.u32 %s875, 4
          %s886 = int_to_ptr.vmem [resolvable:$true] %s885
          %s887 = sshll.u32 %s883, 4
          %s888 = int_to_ptr.hbm [resolvable:$true] %s887
          %890 = dma.vmem_to_hbm [thread:$0]  %s886, 384, %s888, %s872
        $region60: #{tpu_custom_call.1} parent=51 // pred_fallthru
          _
      $region52: #{tpu_custom_call.1} parent=5 // pred_fallthru
        _
      %p891 = scmp.le.s32.totalorder 2, %s20
      // Predicated region
      $region61: #{tpu_custom_call.1} parent=5 // pred_check
        %p892 = pneg %p891
      $region62: #{tpu_custom_call.1} parent=5 // pred_check_branch
        %894 = sbr.rel (%p892) target = $region64
      $region63: #{tpu_custom_call.1} parent=5 // pred_region
        %s895 = ssub.s32 %s20, 2
        // Predicated region
        $region65: #{tpu_custom_call.1} parent=63 // pred_check
          %p896 = pneg %p232
        $region66: #{tpu_custom_call.1} parent=63 // pred_check_branch
          %898 = sbr.rel (%p896) target = $region68
        $region67: #{tpu_custom_call.1} parent=63 // pred_region
          %s899 = sand.u32 %s217, 1
          %s900 = scalar_lea.sflag [#allocation4], %s899
          %s901 = sand.u32 %s217, 1
          %s902 = smul.addr %s901, 24
          %s903 = scalar_lea.vmem [#allocation5], %s902
          %905 = dma.done %s900, 384
        $region68: #{tpu_custom_call.1} parent=63 // pred_fallthru
          _
      $region64: #{tpu_custom_call.1} parent=5 // pred_fallthru
        _
    $region6: #{tpu_custom_call.1} parent=1 // loop_footer
      %s24 = sadd.s32 1, %s20
    $region7: #{tpu_custom_call.1} parent=1 // loop_footer_branch
      %19 = sbr.rel target = $region3
    $region8: #{tpu_custom_call.1} parent=1 // loop_exit
      _
    %906 = vsyncpa [#allocation3], 1
    %s907 = scalar_lea.sflag [#allocation3], 1
    %908 = vsyncpa %s907, 1
    %909 = vsyncpa [#allocation4], 1
    %s910 = scalar_lea.sflag [#allocation4], 1
    %911 = vsyncpa %s910, 1

</llo_original>
